<compile_context>
chip_gen: v7x
topology: tpu7x:2x2x1
jax: 0.10.0
libtpu: 0.0.40
codegen_flags: <defaults>
</compile_context>

<pallas_src>
import math

import jax
import jax.numpy as jnp
from jax.experimental import pallas as pl
from jax.experimental.pallas import tpu as pltpu

# ----------------------- small, self-consistent configuration -----------------------
BATCH = 2
NUM_QUERIES = 16
NUM_CLASSES = 20            # the module hard-codes `.repeat(1, 1, 20)` in get_topk
TOPK = 8                    # seq_length
PATCH_HW = (8, 16)          # 3 * 8 * 16 = 384 -> embed dim, matches Linear(384, 384)
EMBED = 3 * PATCH_HW[0] * PATCH_HW[1]
IMG = 32                    # square input images (B, 3, IMG, IMG)


# ------------------------------ Pallas kernel (hot path) -----------------------------
def _make_v2v_kernel(B, S, D):
    inv_sqrt_dk = 1.0 / math.sqrt(D)
    N = B * S

    def kernel(g_ref, a_ref, wgt_ref, wat_hbm_ref, boxcost_ref, out_ref,
               wat_vmem, dma_sem):
        # Start the second weight's HBM->VMEM DMA immediately; it overlaps with
        # the first projection and is only waited on right before it is needed.
        cp = pltpu.make_async_copy(wat_hbm_ref, wat_vmem, dma_sem)
        cp.start()

        # Activations with batch folded into sublanes: (B*S, D) bf16.
        g = g_ref[...]
        a = a_ref[...]
        # Pre-transposed, cached bf16 weight (nn.Linear: y = x @ W.T) -> plain
        # matmul, no in-kernel XLU transpose, no per-call transpose/convert op.
        wgt = wgt_ref[...]

        gt = jnp.dot(g, wgt, preferred_element_type=jnp.float32)    # (B*S, D) f32

        cp.wait()                                                    # W_aerial resident
        at = jnp.dot(a, wat_vmem[...], preferred_element_type=jnp.float32)

        # bmm(gt, at.transpose(1, 2)) / sqrt(d_k): contract the last dims
        # directly (no materialized transpose). bf16 MXU operands (single-pass),
        # f32 accumulation.
        gt3 = gt.reshape(B, S, D).astype(jnp.bfloat16)
        at3 = at.reshape(B, S, D).astype(jnp.bfloat16)
        sim = jnp.einsum('bik,bjk->bij', gt3, at3,
                         preferred_element_type=jnp.float32) * inv_sqrt_dk

        # F.softmax(similarity_matrices, dim=1) -> softmax over the ground (row)
        # axis. Exact divide: keeps row sums at 1 (Hungarian-assignment parity)
        # and costs nothing at this size.
        m = jnp.max(sim, axis=1, keepdims=True)
        e = jnp.exp(sim - m)
        sim_sm = e / jnp.sum(e, axis=1, keepdims=True)

        # similarity cost: max over dim=2 (aerial axis), then max - sim; the
        # tiny O(S^2) y-area + ratio box cost slab is precomputed in the wrapper.
        max_sim = jnp.max(sim_sm, axis=2, keepdims=True)
        cost = (max_sim - sim_sm).reshape(N, S) + boxcost_ref[...]

        # Fused lane-denser output slab: [:, :S] = cost, [:, S:] = similarity.
        out_ref[...] = jnp.concatenate([cost, sim_sm.reshape(N, S)], axis=-1)

    return kernel


def pairwise_cost_pallas(tensor_g, tensor_a, wg_t_bf16, wa_t_bf16, g_boxes, a_boxes):
    B, S, D = tensor_g.shape
    N = B * S

    # --- wrapper-side prep ------------------------------------------------------------
    # 1) fold batch into sublanes -> single grid-less kernel step
    # 2) bf16 MXU operands (accumulation stays f32 inside the kernel)
    # 3) weights arrive already pre-transposed + bf16 (cached in params)
    # 4) build the lane-sparse O(S^2) box cost terms here (no (1,S,4) blocks,
    #    width-1 slices or divides inside the kernel)
    g2 = tensor_g.reshape(N, D).astype(jnp.bfloat16)
    a2 = tensor_a.reshape(N, D).astype(jnp.bfloat16)

    # get_y_area_cost + construct_cost_matrix_with_ratio on xyxy boxes, exactly as the
    # module does (it divides by raw coords as-is; a degenerate box would inf/nan
    # there too -- kept for strict parity).
    y_cost = jnp.abs(g_boxes[:, :, 1][:, :, None]
                     - (a_boxes[:, :, 2] * a_boxes[:, :, 3])[:, None, :])
    r_cost = jnp.abs((g_boxes[:, :, 2] / g_boxes[:, :, 3])[:, :, None]
                     - (a_boxes[:, :, 2] / a_boxes[:, :, 3])[:, None, :])
    box_cost = (y_cost + r_cost).astype(jnp.float32).reshape(N, S)

    vmem = pl.BlockSpec(memory_space=pltpu.MemorySpace.VMEM)
    out = pl.pallas_call(
        _make_v2v_kernel(B, S, D),
        out_shape=jax.ShapeDtypeStruct((N, 2 * S), jnp.float32),
        in_specs=[vmem, vmem, vmem,
                  pl.BlockSpec(memory_space=pl.ANY),   # W_aerial: manual overlapped DMA
                  vmem],
        out_specs=vmem,
        scratch_shapes=[pltpu.VMEM((D, D), jnp.bfloat16),
                        pltpu.SemaphoreType.DMA(())],
    )(g2, a2, wg_t_bf16, wa_t_bf16, box_cost)

    cost_matrix = out[:, :S].reshape(B, S, S)
    pairwise_similarity = out[:, S:].reshape(B, S, S)
    return cost_matrix, pairwise_similarity


# ----------------------------------- JAX glue ---------------------------------------
def box_cxcywh_to_xyxy(b):
    cx, cy, w, h = jnp.split(b, 4, axis=-1)
    return jnp.concatenate([cx - 0.5 * w, cy - 0.5 * h, cx + 0.5 * w, cy + 0.5 * h],
                           axis=-1)


def get_topk(out_logits, out_bbox, topk):
    B, Q, C = out_logits.shape
    prob = jax.nn.sigmoid(out_logits)
    topk_values, topk_indexes = jax.lax.top_k(prob.reshape(B, -1), topk)
    scores = topk_values
    topk_boxes = topk_indexes // C
    boxes = box_cxcywh_to_xyxy(out_bbox)
    idx4 = jnp.broadcast_to(topk_boxes[:, :, None], (B, topk, 4))
    boxes = jnp.take_along_axis(boxes, idx4, axis=1)
    idxC = jnp.broadcast_to(topk_boxes[:, :, None], (B, topk, C))
    selected_logits = jnp.take_along_axis(out_logits, idxC, axis=1)
    selected_boxes = jnp.take_along_axis(out_bbox, idx4, axis=1)
    top_k_outputs = {'pred_logits': selected_logits, 'pred_boxes': selected_boxes}
    return scores, boxes, top_k_outputs


def _crop_resize_bilinear(img, box_px, out_hw):
    """Crop img[:, y0:y1, x0:x1] and bilinearly resize to out_hw
    (matches F.interpolate(mode='bilinear', align_corners=False))."""
    ph, pw = out_hw
    x0, y0, x1, y1 = box_px[0], box_px[1], box_px[2], box_px[3]
    hc = y1 - y0
    wc = x1 - x0
    valid = jnp.logical_and(hc > 0, wc > 0)
    hc_s = jnp.maximum(hc, 1)
    wc_s = jnp.maximum(wc, 1)

    ys = jnp.maximum(
        (jnp.arange(ph, dtype=jnp.float32) + 0.5) * hc_s.astype(jnp.float32) / ph - 0.5, 0.0)
    xs = jnp.maximum(
        (jnp.arange(pw, dtype=jnp.float32) + 0.5) * wc_s.astype(jnp.float32) / pw - 0.5, 0.0)
    yi0 = jnp.floor(ys).astype(jnp.int32)
    xi0 = jnp.floor(xs).astype(jnp.int32)
    wy = ys - yi0
    wx = xs - xi0
    yi0 = jnp.clip(yi0, 0, hc_s - 1)
    xi0 = jnp.clip(xi0, 0, wc_s - 1)
    yi1 = jnp.clip(yi0 + 1, 0, hc_s - 1)
    xi1 = jnp.clip(xi0 + 1, 0, wc_s - 1)

    def gather(yy, xx):
        return img[:, (y0 + yy)[:, None], (x0 + xx)[None, :]]   # (3, ph, pw)

    v00, v01 = gather(yi0, xi0), gather(yi0, xi1)
    v10, v11 = gather(yi1, xi0), gather(yi1, xi1)
    w00 = (1.0 - wy)[:, None] * (1.0 - wx)[None, :]
    w01 = (1.0 - wy)[:, None] * wx[None, :]
    w10 = wy[:, None] * (1.0 - wx)[None, :]
    w11 = wy[:, None] * wx[None, :]
    out = v00 * w00 + v01 * w01 + v10 * w10 + v11 * w11
    out = jnp.where(valid, out, jnp.zeros_like(out))            # degenerate box -> zeros
    return out.reshape(3, ph * pw)


def extract_patches(images, boxes_xyxy, out_hw):
    """(B,3,H,W), (B,K,4) normalized xyxy -> (B,K,3,ph*pw); i.e. the .squeeze() of the
    module's (B,K,3,1,ph*pw) resized_roi_patches."""
    B, C, H, W = images.shape
    scale = jnp.array([W, H, W, H], dtype=boxes_xyxy.dtype)
    box_px = jnp.round(boxes_xyxy * scale[None, None, :]).astype(jnp.int32)
    per_box = jax.vmap(lambda img, b: _crop_resize_bilinear(img, b, out_hw),
                       in_axes=(None, 0))
    per_img = jax.vmap(per_box, in_axes=(0, 0))
    return per_img(images, box_px)


def make_positional_encoding(batch, seq, dim):
    pos = jnp.arange(seq, dtype=jnp.float32)[:, None]
    div = jnp.exp(jnp.arange(0, dim, 2, dtype=jnp.float32) * (-math.log(10000.0) / dim))
    pe = jnp.zeros((seq, dim), jnp.float32)
    pe = pe.at[:, 0::2].set(jnp.sin(pos * div))
    pe = pe.at[:, 1::2].set(jnp.cos(pos * div))
    return jnp.broadcast_to(pe[None], (batch, seq, dim))


def prepare_params(W_ground, W_aerial):
    """One-time parameter prep: cache pre-transposed bf16 MXU weights so the
    forward path never re-transposes / re-casts the constant Linear weights."""
    return {
        'W_ground': W_ground,
        'W_aerial': W_aerial,
        'Wg_T_bf16': jnp.asarray(W_ground.T, dtype=jnp.bfloat16),
        'Wa_T_bf16': jnp.asarray(W_aerial.T, dtype=jnp.bfloat16),
        'pos_enc': make_positional_encoding(BATCH, TOPK, EMBED),
    }


def view2view_forward(params, g_samples, a_samples, g_outputs, a_outputs):
    g_scores, g_boxes, g_top_k_outputs = get_topk(
        g_outputs['pred_logits'], g_outputs['pred_boxes'], TOPK)
    a_scores, a_boxes, a_top_k_outputs = get_topk(
        a_outputs['pred_logits'], a_outputs['pred_boxes'], TOPK)

    g_patches = extract_patches(g_samples, g_boxes, PATCH_HW)   # (B, K, 3, ph*pw)
    a_patches = extract_patches(a_samples, a_boxes, PATCH_HW)

    B = g_patches.shape[0]
    # reproduce the module's permute(1,0,2,3).reshape(batch, seq, embed) exactly
    tensor_g = jnp.transpose(g_patches, (1, 0, 2, 3)).reshape(B, TOPK, EMBED)
    tensor_a = jnp.transpose(a_patches, (1, 0, 2, 3)).reshape(B, TOPK, EMBED)
    tensor_g = tensor_g + params['pos_enc']
    tensor_a = tensor_a + params['pos_enc']

    cost_matrix, pairwise_similarity = pairwise_cost_pallas(
        tensor_g, tensor_a, params['Wg_T_bf16'], params['Wa_T_bf16'],
        g_boxes, a_boxes)

    # TODO(synk): scipy.optimize.linear_sum_assignment (Hungarian) is a host-side
    # combinatorial solver with no Pallas equivalent; done on host if scipy is present.
    assignments = None
    try:
        from scipy.optimize import linear_sum_assignment
        import numpy as np
        cm = np.asarray(cost_matrix)
        assignments = [linear_sum_assignment(cm[b]) for b in range(cm.shape[0])]
    except Exception:
        pass

    return {
        'cost_matrix': cost_matrix,
        'pairwise_similarity': pairwise_similarity,
        'assignments': assignments,
        'g_top_k_outputs': g_top_k_outputs,
        'a_top_k_outputs': a_top_k_outputs,
        'tensor_g': tensor_g,
        'tensor_a': tensor_a,
        'g_boxes': g_boxes,
        'a_boxes': a_boxes,
    }


# ------------------------- pure-JAX reference of the kernel math ---------------------
def pairwise_cost_ref(tensor_g, tensor_a, wg, wa, g_boxes, a_boxes):
    B, S, D = tensor_g.shape
    # mirror the kernel numerics: bf16 MXU operands everywhere, f32 accumulation
    gt = jnp.dot(tensor_g.astype(jnp.bfloat16), wg.T.astype(jnp.bfloat16),
                 preferred_element_type=jnp.float32)
    at = jnp.dot(tensor_a.astype(jnp.bfloat16), wa.T.astype(jnp.bfloat16),
                 preferred_element_type=jnp.float32)
    sim = jnp.einsum('bik,bjk->bij',
                     gt.astype(jnp.bfloat16), at.astype(jnp.bfloat16),
                     preferred_element_type=jnp.float32) * (1.0 / math.sqrt(D))
    sim = jax.nn.softmax(sim, axis=1)
    max_sim = jnp.max(sim, axis=2, keepdims=True)
    sim_cost = max_sim - sim
    y_cost = jnp.abs(g_boxes[:, :, 1][:, :, None]
                     - (a_boxes[:, :, 2] * a_boxes[:, :, 3])[:, None, :])
    r_cost = jnp.abs((g_boxes[:, :, 2] / g_boxes[:, :, 3])[:, :, None]
                     - (a_boxes[:, :, 2] / a_boxes[:, :, 3])[:, None, :])
    return sim_cost + y_cost + r_cost, sim


# --------------------------------------- main ----------------------------------------
if __name__ == "__main__":
    key = jax.random.PRNGKey(0)
    ks = jax.random.split(key, 8)

    g_samples = jax.random.normal(ks[0], (BATCH, 3, IMG, IMG), jnp.float32)
    a_samples = jax.random.normal(ks[1], (BATCH, 3, IMG, IMG), jnp.float32)

    g_logits = jax.random.normal(ks[2], (BATCH, NUM_QUERIES, NUM_CLASSES), jnp.float32)
    a_logits = jax.random.normal(ks[3], (BATCH, NUM_QUERIES, NUM_CLASSES), jnp.float32)

    def make_boxes(k):
        # normalized cxcywh boxes that stay inside the image after xyxy conversion
        cxcy = 0.3 + 0.4 * jax.random.uniform(k, (BATCH, NUM_QUERIES, 2))
        wh = 0.1 + 0.15 * jax.random.uniform(jax.random.fold_in(k, 1),
                                             (BATCH, NUM_QUERIES, 2))
        return jnp.concatenate([cxcy, wh], axis=-1).astype(jnp.float32)

    g_pred_boxes = make_boxes(ks[4])
    a_pred_boxes = make_boxes(ks[5])

    limit = 1.0 / math.sqrt(EMBED)   # deterministic stand-in for nn.Linear init
    W_ground = jax.random.uniform(ks[6], (EMBED, EMBED), jnp.float32, -limit, limit)
    W_aerial = jax.random.uniform(ks[7], (EMBED, EMBED), jnp.float32, -limit, limit)

    params = prepare_params(W_ground, W_aerial)   # weights pre-transposed/cast ONCE

    g_outputs = {'pred_logits': g_logits, 'pred_boxes': g_pred_boxes}
    a_outputs = {'pred_logits': a_logits, 'pred_boxes': a_pred_boxes}

    out = view2view_forward(params, g_samples, a_samples, g_outputs, a_outputs)
    cost = jax.block_until_ready(out['cost_matrix'])
    sim = jax.block_until_ready(out['pairwise_similarity'])

    # sanity: finite + matches a pure-JAX reference of the fused kernel math
    assert bool(jnp.isfinite(cost).all()) and bool(jnp.isfinite(sim).all())
    cost_ref, sim_ref = pairwise_cost_ref(out['tensor_g'], out['tensor_a'],
                                          W_ground, W_aerial,
                                          out['g_boxes'], out['a_boxes'])
    assert jnp.allclose(cost, cost_ref, rtol=1e-2, atol=1e-2)
    assert jnp.allclose(sim, sim_ref, rtol=1e-2, atol=1e-2)

    print("KERNEL_OK")
</pallas_src>

<mosaic_0001>
module attributes {stable_mosaic.version = 11 : i64} {
  func.func @kernel(%arg0: memref<16x384xbf16, #tpu.memory_space<vmem>>, %arg1: memref<16x384xbf16, #tpu.memory_space<vmem>>, %arg2: memref<384x384xbf16, #tpu.memory_space<vmem>>, %arg3: memref<384x384xbf16, #tpu.memory_space<any>>, %arg4: memref<16x8xf32, #tpu.memory_space<vmem>>, %arg5: memref<16x16xf32, #tpu.memory_space<vmem>>, %arg6: memref<384x384xbf16, #tpu.memory_space<vmem>>, %arg7: memref<!tpu.dma_semaphore, #tpu.memory_space<semaphore_mem>>) attributes {dimension_semantics = [], scalar_prefetch = 0 : i64, scratch_operands = 2 : i64, tpu.core_type = #tpu.core_type<tc>} {
    tpu.enqueue_dma source(%arg3 : memref<384x384xbf16, #tpu.memory_space<any>>) target(%arg6 : memref<384x384xbf16, #tpu.memory_space<vmem>>) target_semaphore(%arg7 : memref<!tpu.dma_semaphore, #tpu.memory_space<semaphore_mem>>)
    %c0 = arith.constant 0 : index
    %c0_0 = arith.constant 0 : index
    %0 = vector.load %arg0[%c0, %c0_0] : memref<16x384xbf16, #tpu.memory_space<vmem>>, vector<16x384xbf16>
    %c0_1 = arith.constant 0 : index
    %c0_2 = arith.constant 0 : index
    %1 = vector.load %arg1[%c0_1, %c0_2] : memref<16x384xbf16, #tpu.memory_space<vmem>>, vector<16x384xbf16>
    %c0_3 = arith.constant 0 : index
    %c0_4 = arith.constant 0 : index
    %2 = vector.load %arg2[%c0_3, %c0_4] : memref<384x384xbf16, #tpu.memory_space<vmem>>, vector<384x384xbf16>
    %cst = arith.constant dense<0.000000e+00> : vector<16x384xf32>
    %3 = tpu.matmul %0, %2, %cst {dimension_numbers = #tpu.dot_dimension_numbers<[1], [0], [0], [1], [0, 0, 1, 1], [], []>} : vector<16x384xbf16>, vector<384x384xbf16>, vector<16x384xf32> -> vector<16x384xf32>
    tpu.wait_dma2 semaphore(%arg7 : memref<!tpu.dma_semaphore, #tpu.memory_space<semaphore_mem>>) src(%arg3 : memref<384x384xbf16, #tpu.memory_space<any>>) dst(%arg6 : memref<384x384xbf16, #tpu.memory_space<vmem>>)
    %c0_5 = arith.constant 0 : index
    %c0_6 = arith.constant 0 : index
    %4 = vector.load %arg6[%c0_5, %c0_6] : memref<384x384xbf16, #tpu.memory_space<vmem>>, vector<384x384xbf16>
    %cst_7 = arith.constant dense<0.000000e+00> : vector<16x384xf32>
    %5 = tpu.matmul %1, %4, %cst_7 {dimension_numbers = #tpu.dot_dimension_numbers<[1], [0], [0], [1], [0, 0, 1, 1], [], []>} : vector<16x384xbf16>, vector<384x384xbf16>, vector<16x384xf32> -> vector<16x384xf32>
    %6 = vector.shape_cast %3 : vector<16x384xf32> to vector<2x8x384xf32>
    %7 = arith.truncf %6 : vector<2x8x384xf32> to vector<2x8x384xbf16>
    %8 = vector.shape_cast %5 : vector<16x384xf32> to vector<2x8x384xf32>
    %9 = arith.truncf %8 : vector<2x8x384xf32> to vector<2x8x384xbf16>
    "tpu.trace_start"() <{level = 10 : i32, message = "bik,bjk->bij"}> : () -> ()
    %cst_8 = arith.constant dense<0.000000e+00> : vector<2x8x8xf32>
    %10 = tpu.matmul %7, %9, %cst_8 {dimension_numbers = #tpu.dot_dimension_numbers<[2], [2], [1], [1], [0, 0, 0, 1, 1, 1], [0], [0]>} : vector<2x8x384xbf16>, vector<2x8x384xbf16>, vector<2x8x8xf32> -> vector<2x8x8xf32>
    "tpu.trace_stop"() : () -> ()
    %cst_9 = arith.constant 0.0510310382 : f32
    %11 = vector.broadcast %cst_9 : f32 to vector<2x8x8xf32>
    %12 = arith.mulf %10, %11 : vector<2x8x8xf32>
    %cst_10 = arith.constant dense<0xFF800000> : vector<2x8xf32>
    %13 = vector.multi_reduction <maximumf>, %12, %cst_10 [1] : vector<2x8x8xf32> to vector<2x8xf32>
    %14 = vector.shape_cast %13 : vector<2x8xf32> to vector<2x1x8xf32>
    %15 = vector.broadcast %14 : vector<2x1x8xf32> to vector<2x8x8xf32>
    %16 = arith.subf %12, %15 : vector<2x8x8xf32>
    %17 = math.exp %16 : vector<2x8x8xf32>
    %cst_11 = arith.constant dense<0.000000e+00> : vector<2x8xf32>
    %18 = vector.multi_reduction <add>, %17, %cst_11 [1] : vector<2x8x8xf32> to vector<2x8xf32>
    %19 = vector.shape_cast %18 : vector<2x8xf32> to vector<2x1x8xf32>
    %20 = vector.broadcast %19 : vector<2x1x8xf32> to vector<2x8x8xf32>
    %21 = arith.divf %17, %20 : vector<2x8x8xf32>
    %cst_12 = arith.constant dense<0xFF800000> : vector<2x8xf32>
    %22 = vector.multi_reduction <maximumf>, %21, %cst_12 [2] : vector<2x8x8xf32> to vector<2x8xf32>
    %23 = vector.shape_cast %22 : vector<2x8xf32> to vector<2x8x1xf32>
    %24 = vector.broadcast %23 : vector<2x8x1xf32> to vector<2x8x8xf32>
    %25 = arith.subf %24, %21 : vector<2x8x8xf32>
    %26 = vector.shape_cast %25 : vector<2x8x8xf32> to vector<16x8xf32>
    %c0_13 = arith.constant 0 : index
    %c0_14 = arith.constant 0 : index
    %27 = vector.load %arg4[%c0_13, %c0_14] : memref<16x8xf32, #tpu.memory_space<vmem>>, vector<16x8xf32>
    %28 = arith.addf %26, %27 : vector<16x8xf32>
    %29 = vector.shape_cast %21 : vector<2x8x8xf32> to vector<16x8xf32>
    %30 = tpu.concatenate %28, %29 in 1 : vector<16x8xf32>, vector<16x8xf32> -> vector<16x16xf32>
    %c0_15 = arith.constant 0 : index
    %c0_16 = arith.constant 0 : index
    %31 = vector.load %arg5[%c0_15, %c0_16] : memref<16x16xf32, #tpu.memory_space<vmem>>, vector<16x16xf32>
    tpu.vector_store %arg5[%c0_15, %c0_16], %30 {strides = array<i32>} : memref<16x16xf32, #tpu.memory_space<vmem>>, vector<16x16xf32>,
    return
  }
}

</mosaic_0001>

<llo_original>
// kernel: tpu_custom_call.1
$region0: #{tpu_custom_call.1}
  #allocation0 [shape = 'u32[]', space=smem, size = 0x4, offset = 0x4, fixed_abs, tag = 'smem constant byte address 0x4 - core index']
  #allocation1 [shape = 'u32[144,128]{1,0:T(1,128)}', space=vmem, size = 0x12000, scoped, tag = 'internal scratch']
  #allocation2 [shape = 'bf16[384,384]{1,0:T(16,128)(2,1)}', space=vmem, size = 0x48000, scoped, tag = 'scratch operand']
  #allocation3 [shape = 's32[1]{0}', space=sflag, size = 0x4, scoped, tag = 'scratch operand']
  #allocation10 [shape = 's32[]', space=sflag, size = 0x4, offset = 0, fixed_abs, tag = 'sflag constant byte address 0x0 - dummy sync flag']
  %s0 = inlined_call_operand.vmem [shape: bf16[16,384], index: 0, kind: input, shape index: {}]
  %s1 = inlined_call_operand.hbm [shape: bf16[16,384], index: 1, kind: input, shape index: {}]
  %s2 = inlined_call_operand.hbm [shape: bf16[384,384], index: 2, kind: input, shape index: {}]
  %s3 = inlined_call_operand.hbm [shape: bf16[384,384], index: 3, kind: input, shape index: {}]
  %s4 = inlined_call_operand.vmem [shape: f32[16,8], index: 4, kind: input, shape index: {}]
  %s5 = inlined_call_operand.hbm [shape: f32[16,16], index: 5, kind: output, shape index: {}]
  %s6 = sld [smem:[#allocation0]]
  $region34: #{tpu_custom_call.1} parent=0
    _
  %s8 = ssub.s32 1, %s6
  %s9 = scalar_select 0, %s8, %s6
  $region1: #{tpu_custom_call.1} parent=0
    #allocation4 [shape = 'u8[12288]{0}', space=vmem, size = 0x3000, scoped, tag = 'input window, operand 1, single buffered']
    #allocation5 [shape = 's32[1]{0}', space=sflag, size = 0x4, scoped, tag = 'scoped memory for tpu_custom_call.1']
    #allocation6 [shape = 's32[1]{0}', space=sflag, size = 0x4, scoped, tag = 'scoped memory for tpu_custom_call.1']
    #allocation7 [shape = 'u8[294912]{0}', space=vmem, size = 0x48000, scoped, tag = 'input window, operand 2, single buffered']
    #allocation8 [shape = 's32[1]{0}', space=sflag, size = 0x4, scoped, tag = 'scoped memory for tpu_custom_call.1']
    #allocation9 [shape = 'u8[8192]{0}', space=vmem, size = 0x2000, scoped, tag = 'output window, operand 0, single buffered']
    #allocation11 [shape = 'u32[9]{0}', space=smem, size = 0x24, scoped, tag = 'DMA stride descriptor']
    %10 = vsyncpa [#allocation5], 0
    %11 = vsyncpa [#allocation8], 0
    %12 = vsyncpa [#allocation6], 0
    // Predicated region
    $region2: #{tpu_custom_call.1} parent=1 // pred_check
      _
    $region3: #{tpu_custom_call.1} parent=1 // pred_check_branch
      %14 = sbr.rel (0) target = $region5
    $region4: #{tpu_custom_call.1} parent=1 // pred_region
      _
    $region5: #{tpu_custom_call.1} parent=1 // pred_fallthru
      _
    // Predicated region
    $region6: #{tpu_custom_call.1} parent=1 // pred_check
      _
    $region7: #{tpu_custom_call.1} parent=1 // pred_check_branch
      %16 = sbr.rel (0) target = $region9
    $region8: #{tpu_custom_call.1} parent=1 // pred_region
      %s18 = ssub.s32 384, 384
      %19 = vsyncadd [#allocation5], %s18
      %s20 = sshll.u32 [#allocation4], 4
      %s21 = int_to_ptr.vmem [resolvable:$true] %s20
      %26 = dma.hbm_to_vmem [thread:$0]  %s1, 384, %s21, [#allocation5], 192, 192, 12
    $region9: #{tpu_custom_call.1} parent=1 // pred_fallthru
      _
    // Predicated region
    $region10: #{tpu_custom_call.1} parent=1 // pred_check
      _
    $region11: #{tpu_custom_call.1} parent=1 // pred_check_branch
      %28 = sbr.rel (0) target = $region13
    $region12: #{tpu_custom_call.1} parent=1 // pred_region
      %s30 = ssub.s32 9216, 9216
      %31 = vsyncadd [#allocation8], %s30
      %s32 = sshll.u32 [#allocation7], 4
      %s33 = int_to_ptr.vmem [resolvable:$true] %s32
      %38 = dma.hbm_to_vmem [thread:$0]  %s2, 9216, %s33, [#allocation8], 192, 192, 12
    $region13: #{tpu_custom_call.1} parent=1 // pred_fallthru
      _
    // Predicated region
    $region14: #{tpu_custom_call.1} parent=1 // pred_check
      _
    $region15: #{tpu_custom_call.1} parent=1 // pred_check_branch
      %40 = sbr.rel (0) target = $region17
    $region16: #{tpu_custom_call.1} parent=1 // pred_region
      _
    $region17: #{tpu_custom_call.1} parent=1 // pred_fallthru
      _
    // Predicated region
    $region18: #{tpu_custom_call.1} parent=1 // pred_check
      _
    $region19: #{tpu_custom_call.1} parent=1 // pred_check_branch
      %42 = sbr.rel (0) target = $region21
    $region20: #{tpu_custom_call.1} parent=1 // pred_region
      %43 = dma.done [#allocation5], 384
    $region21: #{tpu_custom_call.1} parent=1 // pred_fallthru
      _
    // Predicated region
    $region22: #{tpu_custom_call.1} parent=1 // pred_check
      _
    $region23: #{tpu_custom_call.1} parent=1 // pred_check_branch
      %45 = sbr.rel (0) target = $region25
    $region24: #{tpu_custom_call.1} parent=1 // pred_region
      %46 = dma.done [#allocation8], 9216
    $region25: #{tpu_custom_call.1} parent=1 // pred_fallthru
      _
    %s49 = sshll.u32 1, 14
    %s50 = sxor.u32 4294967295, %s49
    %s52 = sld [smem:[#allocation0]]
    %s53 = sadd.s32 2, %s52
    %s55 = sshll.u32 7, 26
    %s56 = sxor.u32 4294967295, %s55
    %s57 = sand.u32 0, %s56
    %s58 = sshll.u32 %s53, 26
    %s59 = sor.u32 %s57, %s58
    %s60 = sshll.u32 [#allocation2], 4
    %s61 = int_to_ptr.vmem [resolvable:$true] %s60
    %64 = sst [smem:[#allocation11]] 384
    %s65 = scalar_lea.smem [#allocation11], 1
    %66 = sst [smem:[%s65]] 384
    %s67 = scalar_lea.smem [#allocation11], 2
    %68 = sst [smem:[%s67]] 3
    %s69 = scalar_lea.smem [#allocation11], 3
    %70 = sst [smem:[%s69]] 64
    %s71 = scalar_lea.smem [#allocation11], 4
    %72 = sst [smem:[%s71]] 128
    %s73 = scalar_lea.smem [#allocation11], 5
    %74 = sst [smem:[%s73]] 2
    %s75 = scalar_lea.smem [#allocation11], 6
    %76 = sst [smem:[%s75]] 192
    %s77 = scalar_lea.smem [#allocation11], 7
    %78 = sst [smem:[%s77]] 64
    %s79 = scalar_lea.smem [#allocation11], 8
    %80 = sst [smem:[%s79]] 4
    %82 = dma.general %s3, 9216, %s61, [#allocation3], [#allocation10], [#allocation11], %s59, 0
    %v83 = vld [vmem:[%s0] sm:$0xff]
    %v84 = vld [vmem:[%s0 + $0x8] sm:$0xf]
    %v85 = vld [vmem:[%s0 + $0xc] sm:$0xff]
    %v86 = vld [vmem:[%s0 + $0x14] sm:$0xf]
    %v87 = vld [vmem:[#allocation4] sm:$0xff]
    %v88 = vld [vmem:[#allocation4 + $0x8] sm:$0xf]
    %v89 = vld [vmem:[#allocation4 + $0xc] sm:$0xff]
    %v90 = vld [vmem:[#allocation4 + $0x14] sm:$0xf]
    %v91 = vld [vmem:[#allocation7] sm:$0xff]
    %v92 = vld [vmem:[#allocation7 + $0x8] sm:$0xf]
    %v93 = vld [vmem:[#allocation7 + $0xc] sm:$0xff]
    %v94 = vld [vmem:[#allocation7 + $0x14] sm:$0xf]
    %v95 = vld [vmem:[#allocation7 + $0x18] sm:$0xff]
    %v96 = vld [vmem:[#allocation7 + $0x20] sm:$0xf]
    %v97 = vld [vmem:[#allocation7 + $0x24] sm:$0xff]
    %v98 = vld [vmem:[#allocation7 + $0x2c] sm:$0xf]
    %v99 = vld [vmem:[#allocation7 + $0x30] sm:$0xff]
    %v100 = vld [vmem:[#allocation7 + $0x38] sm:$0xf]
    %v101 = vld [vmem:[#allocation7 + $0x3c] sm:$0xff]
    %v102 = vld [vmem:[#allocation7 + $0x44] sm:$0xf]
    %v103 = vld [vmem:[#allocation7 + $0x48] sm:$0xff]
    %v104 = vld [vmem:[#allocation7 + $0x50] sm:$0xf]
    %v105 = vld [vmem:[#allocation7 + $0x54] sm:$0xff]
    %v106 = vld [vmem:[#allocation7 + $0x5c] sm:$0xf]
    %v107 = vld [vmem:[#allocation7 + $0x60] sm:$0xff]
    %v108 = vld [vmem:[#allocation7 + $0x68] sm:$0xf]
    %v109 = vld [vmem:[#allocation7 + $0x6c] sm:$0xff]
    %v110 = vld [vmem:[#allocation7 + $0x74] sm:$0xf]
    %v111 = vld [vmem:[#allocation7 + $0x78] sm:$0xff]
    %v112 = vld [vmem:[#allocation7 + $0x80] sm:$0xf]
    %v113 = vld [vmem:[#allocation7 + $0x84] sm:$0xff]
    %v114 = vld [vmem:[#allocation7 + $0x8c] sm:$0xf]
    %v115 = vld [vmem:[#allocation7 + $0x90] sm:$0xff]
    %v116 = vld [vmem:[#allocation7 + $0x98] sm:$0xf]
    %v117 = vld [vmem:[#allocation7 + $0x9c] sm:$0xff]
    %v118 = vld [vmem:[#allocation7 + $0xa4] sm:$0xf]
    %v119 = vld [vmem:[#allocation7 + $0xa8] sm:$0xff]
    %v120 = vld [vmem:[#allocation7 + $0xb0] sm:$0xf]
    %v121 = vld [vmem:[#allocation7 + $0xb4] sm:$0xff]
    %v122 = vld [vmem:[#allocation7 + $0xbc] sm:$0xf]
    %v123 = vld [vmem:[#allocation7 + $0xc0] sm:$0xff]
    %v124 = vld [vmem:[#allocation7 + $0xc8] sm:$0xf]
    %v125 = vld [vmem:[#allocation7 + $0xcc] sm:$0xff]
    %v126 = vld [vmem:[#allocation7 + $0xd4] sm:$0xf]
    %v127 = vld [vmem:[#allocation7 + $0xd8] sm:$0xff]
    %v128 = vld [vmem:[#allocation7 + $0xe0] sm:$0xf]
    %v129 = vld [vmem:[#allocation7 + $0xe4] sm:$0xff]
    %v130 = vld [vmem:[#allocation7 + $0xec] sm:$0xf]
    %v131 = vld [vmem:[#allocation7 + $0xf0] sm:$0xff]
    %v132 = vld [vmem:[#allocation7 + $0xf8] sm:$0xf]
    %v133 = vld [vmem:[#allocation7 + $0xfc] sm:$0xff]
    %v134 = vld [vmem:[#allocation7 + $0x104] sm:$0xf]
    %v135 = vld [vmem:[#allocation7 + $0x108] sm:$0xff]
    %v136 = vld [vmem:[#allocation7 + $0x110] sm:$0xf]
    %v137 = vld [vmem:[#allocation7 + $0x114] sm:$0xff]
    %v138 = vld [vmem:[#allocation7 + $0x11c] sm:$0xf]
    %v139 = vld [vmem:[#allocation7 + $0x120] sm:$0xff]
    %v140 = vld [vmem:[#allocation7 + $0x128] sm:$0xf]
    %v141 = vld [vmem:[#allocation7 + $0x12c] sm:$0xff]
    %v142 = vld [vmem:[#allocation7 + $0x134] sm:$0xf]
    %v143 = vld [vmem:[#allocation7 + $0x138] sm:$0xff]
    %v144 = vld [vmem:[#allocation7 + $0x140] sm:$0xf]
    %v145 = vld [vmem:[#allocation7 + $0x144] sm:$0xff]
    %v146 = vld [vmem:[#allocation7 + $0x14c] sm:$0xf]
    %v147 = vld [vmem:[#allocation7 + $0x150] sm:$0xff]
    %v148 = vld [vmem:[#allocation7 + $0x158] sm:$0xf]
    %v149 = vld [vmem:[#allocation7 + $0x15c] sm:$0xff]
    %v150 = vld [vmem:[#allocation7 + $0x164] sm:$0xf]
    %v151 = vld [vmem:[#allocation7 + $0x168] sm:$0xff]
    %v152 = vld [vmem:[#allocation7 + $0x170] sm:$0xf]
    %v153 = vld [vmem:[#allocation7 + $0x174] sm:$0xff]
    %v154 = vld [vmem:[#allocation7 + $0x17c] sm:$0xf]
    %v155 = vld [vmem:[#allocation7 + $0x180] sm:$0xff]
    %v156 = vld [vmem:[#allocation7 + $0x188] sm:$0xf]
    %v157 = vld [vmem:[#allocation7 + $0x18c] sm:$0xff]
    %v158 = vld [vmem:[#allocation7 + $0x194] sm:$0xf]
    %v159 = vld [vmem:[#allocation7 + $0x198] sm:$0xff]
    %v160 = vld [vmem:[#allocation7 + $0x1a0] sm:$0xf]
    %v161 = vld [vmem:[#allocation7 + $0x1a4] sm:$0xff]
    %v162 = vld [vmem:[#allocation7 + $0x1ac] sm:$0xf]
    %v163 = vld [vmem:[#allocation7 + $0x1b0] sm:$0xff]
    %v164 = vld [vmem:[#allocation7 + $0x1b8] sm:$0xf]
    %v165 = vld [vmem:[#allocation7 + $0x1bc] sm:$0xff]
    %v166 = vld [vmem:[#allocation7 + $0x1c4] sm:$0xf]
    %v167 = vld [vmem:[#allocation7 + $0x1c8] sm:$0xff]
    %v168 = vld [vmem:[#allocation7 + $0x1d0] sm:$0xf]
    %v169 = vld [vmem:[#allocation7 + $0x1d4] sm:$0xff]
    %v170 = vld [vmem:[#allocation7 + $0x1dc] sm:$0xf]
    %v171 = vld [vmem:[#allocation7 + $0x1e0] sm:$0xff]
    %v172 = vld [vmem:[#allocation7 + $0x1e8] sm:$0xf]
    %v173 = vld [vmem:[#allocation7 + $0x1ec] sm:$0xff]
    %v174 = vld [vmem:[#allocation7 + $0x1f4] sm:$0xf]
    %v175 = vld [vmem:[#allocation7 + $0x1f8] sm:$0xff]
    %v176 = vld [vmem:[#allocation7 + $0x200] sm:$0xf]
    %v177 = vld [vmem:[#allocation7 + $0x204] sm:$0xff]
    %v178 = vld [vmem:[#allocation7 + $0x20c] sm:$0xf]
    %v179 = vld [vmem:[#allocation7 + $0x210] sm:$0xff]
    %v180 = vld [vmem:[#allocation7 + $0x218] sm:$0xf]
    %v181 = vld [vmem:[#allocation7 + $0x21c] sm:$0xff]
    %v182 = vld [vmem:[#allocation7 + $0x224] sm:$0xf]
    %v183 = vld [vmem:[#allocation7 + $0x228] sm:$0xff]
    %v184 = vld [vmem:[#allocation7 + $0x230] sm:$0xf]
    %v185 = vld [vmem:[#allocation7 + $0x234] sm:$0xff]
    %v186 = vld [vmem:[#allocation7 + $0x23c] sm:$0xf]
    %v191 = vunpack.c.l.b16 %v83
    %v192 = vunpack.c.h.b16 %v83
    %v193 = vunpack.c.l.b16 %v84
    %v194 = vunpack.c.l.b16 %v85
    %v195 = vunpack.c.h.b16 %v85
    %v196 = vunpack.c.l.b16 %v86
    %v197 = vpack.c.b16 %v194, %v191
    %v198 = vpack.c.b16 %v195, %v192
    %v199 = vpack.c.b16 %v196, %v193
    %v299 = vunpack.c.l.b16 %v91
    %v300 = vunpack.c.h.b16 %v91
    %v301 = vunpack.c.l.b16 %v92
    %v302 = vunpack.c.l.b16 %v93
    %v303 = vunpack.c.h.b16 %v93
    %v304 = vunpack.c.l.b16 %v94
    %v305 = vunpack.c.l.b16 %v95
    %v306 = vunpack.c.h.b16 %v95
    %v307 = vunpack.c.l.b16 %v96
    %v308 = vunpack.c.l.b16 %v97
    %v309 = vunpack.c.h.b16 %v97
    %v310 = vunpack.c.l.b16 %v98
    %v311 = vunpack.c.l.b16 %v99
    %v312 = vunpack.c.h.b16 %v99
    %v313 = vunpack.c.l.b16 %v100
    %v314 = vunpack.c.l.b16 %v101
    %v315 = vunpack.c.h.b16 %v101
    %v316 = vunpack.c.l.b16 %v102
    %v317 = vunpack.c.l.b16 %v103
    %v318 = vunpack.c.h.b16 %v103
    %v319 = vunpack.c.l.b16 %v104
    %v320 = vunpack.c.l.b16 %v105
    %v321 = vunpack.c.h.b16 %v105
    %v322 = vunpack.c.l.b16 %v106
    %v323 = vunpack.c.l.b16 %v107
    %v324 = vunpack.c.h.b16 %v107
    %v325 = vunpack.c.l.b16 %v108
    %v326 = vunpack.c.l.b16 %v109
    %v327 = vunpack.c.h.b16 %v109
    %v328 = vunpack.c.l.b16 %v110
    %v329 = vunpack.c.l.b16 %v111
    %v330 = vunpack.c.h.b16 %v111
    %v331 = vunpack.c.l.b16 %v112
    %v332 = vunpack.c.l.b16 %v113
    %v333 = vunpack.c.h.b16 %v113
    %v334 = vunpack.c.l.b16 %v114
    %v335 = vunpack.c.l.b16 %v115
    %v336 = vunpack.c.h.b16 %v115
    %v337 = vunpack.c.l.b16 %v116
    %v338 = vunpack.c.l.b16 %v117
    %v339 = vunpack.c.h.b16 %v117
    %v340 = vunpack.c.l.b16 %v118
    %v341 = vunpack.c.l.b16 %v119
    %v342 = vunpack.c.h.b16 %v119
    %v343 = vunpack.c.l.b16 %v120
    %v344 = vunpack.c.l.b16 %v121
    %v345 = vunpack.c.h.b16 %v121
    %v346 = vunpack.c.l.b16 %v122
    %v347 = vunpack.c.l.b16 %v123
    %v348 = vunpack.c.h.b16 %v123
    %v349 = vunpack.c.l.b16 %v124
    %v350 = vunpack.c.l.b16 %v125
    %v351 = vunpack.c.h.b16 %v125
    %v352 = vunpack.c.l.b16 %v126
    %v353 = vunpack.c.l.b16 %v127
    %v354 = vunpack.c.h.b16 %v127
    %v355 = vunpack.c.l.b16 %v128
    %v356 = vunpack.c.l.b16 %v129
    %v357 = vunpack.c.h.b16 %v129
    %v358 = vunpack.c.l.b16 %v130
    %v359 = vunpack.c.l.b16 %v131
    %v360 = vunpack.c.h.b16 %v131
    %v361 = vunpack.c.l.b16 %v132
    %v362 = vunpack.c.l.b16 %v133
    %v363 = vunpack.c.h.b16 %v133
    %v364 = vunpack.c.l.b16 %v134
    %v365 = vunpack.c.l.b16 %v135
    %v366 = vunpack.c.h.b16 %v135
    %v367 = vunpack.c.l.b16 %v136
    %v368 = vunpack.c.l.b16 %v137
    %v369 = vunpack.c.h.b16 %v137
    %v370 = vunpack.c.l.b16 %v138
    %v371 = vunpack.c.l.b16 %v139
    %v372 = vunpack.c.h.b16 %v139
    %v373 = vunpack.c.l.b16 %v140
    %v374 = vunpack.c.l.b16 %v141
    %v375 = vunpack.c.h.b16 %v141
    %v376 = vunpack.c.l.b16 %v142
    %v377 = vunpack.c.l.b16 %v143
    %v378 = vunpack.c.h.b16 %v143
    %v379 = vunpack.c.l.b16 %v144
    %v380 = vunpack.c.l.b16 %v145
    %v381 = vunpack.c.h.b16 %v145
    %v382 = vunpack.c.l.b16 %v146
    %v383 = vunpack.c.l.b16 %v147
    %v384 = vunpack.c.h.b16 %v147
    %v385 = vunpack.c.l.b16 %v148
    %v386 = vunpack.c.l.b16 %v149
    %v387 = vunpack.c.h.b16 %v149
    %v388 = vunpack.c.l.b16 %v150
    %v389 = vunpack.c.l.b16 %v151
    %v390 = vunpack.c.h.b16 %v151
    %v391 = vunpack.c.l.b16 %v152
    %v392 = vunpack.c.l.b16 %v153
    %v393 = vunpack.c.h.b16 %v153
    %v394 = vunpack.c.l.b16 %v154
    %v395 = vunpack.c.l.b16 %v155
    %v396 = vunpack.c.h.b16 %v155
    %v397 = vunpack.c.l.b16 %v156
    %v398 = vunpack.c.l.b16 %v157
    %v399 = vunpack.c.h.b16 %v157
    %v400 = vunpack.c.l.b16 %v158
    %v401 = vunpack.c.l.b16 %v159
    %v402 = vunpack.c.h.b16 %v159
    %v403 = vunpack.c.l.b16 %v160
    %v404 = vunpack.c.l.b16 %v161
    %v405 = vunpack.c.h.b16 %v161
    %v406 = vunpack.c.l.b16 %v162
    %v407 = vunpack.c.l.b16 %v163
    %v408 = vunpack.c.h.b16 %v163
    %v409 = vunpack.c.l.b16 %v164
    %v410 = vunpack.c.l.b16 %v165
    %v411 = vunpack.c.h.b16 %v165
    %v412 = vunpack.c.l.b16 %v166
    %v413 = vunpack.c.l.b16 %v167
    %v414 = vunpack.c.h.b16 %v167
    %v415 = vunpack.c.l.b16 %v168
    %v416 = vunpack.c.l.b16 %v169
    %v417 = vunpack.c.h.b16 %v169
    %v418 = vunpack.c.l.b16 %v170
    %v419 = vunpack.c.l.b16 %v171
    %v420 = vunpack.c.h.b16 %v171
    %v421 = vunpack.c.l.b16 %v172
    %v422 = vunpack.c.l.b16 %v173
    %v423 = vunpack.c.h.b16 %v173
    %v424 = vunpack.c.l.b16 %v174
    %v425 = vunpack.c.l.b16 %v175
    %v426 = vunpack.c.h.b16 %v175
    %v427 = vunpack.c.l.b16 %v176
    %v428 = vunpack.c.l.b16 %v177
    %v429 = vunpack.c.h.b16 %v177
    %v430 = vunpack.c.l.b16 %v178
    %v431 = vunpack.c.l.b16 %v179
    %v432 = vunpack.c.h.b16 %v179
    %v433 = vunpack.c.l.b16 %v180
    %v434 = vunpack.c.l.b16 %v181
    %v435 = vunpack.c.h.b16 %v181
    %v436 = vunpack.c.l.b16 %v182
    %v437 = vunpack.c.l.b16 %v183
    %v438 = vunpack.c.h.b16 %v183
    %v439 = vunpack.c.l.b16 %v184
    %v440 = vunpack.c.l.b16 %v185
    %v441 = vunpack.c.h.b16 %v185
    %v442 = vunpack.c.l.b16 %v186
    %v443 = vpack.c.b16 %v302, %v299
    %v444 = vpack.c.b16 %v303, %v300
    %v445 = vpack.c.b16 %v304, %v301
    %v446 = vpack.c.b16 %v308, %v305
    %v447 = vpack.c.b16 %v309, %v306
    %v448 = vpack.c.b16 %v310, %v307
    %v449 = vpack.c.b16 %v314, %v311
    %v450 = vpack.c.b16 %v315, %v312
    %v451 = vpack.c.b16 %v316, %v313
    %v452 = vpack.c.b16 %v320, %v317
    %v453 = vpack.c.b16 %v321, %v318
    %v454 = vpack.c.b16 %v322, %v319
    %v455 = vpack.c.b16 %v326, %v323
    %v456 = vpack.c.b16 %v327, %v324
    %v457 = vpack.c.b16 %v328, %v325
    %v458 = vpack.c.b16 %v332, %v329
    %v459 = vpack.c.b16 %v333, %v330
    %v460 = vpack.c.b16 %v334, %v331
    %v461 = vpack.c.b16 %v338, %v335
    %v462 = vpack.c.b16 %v339, %v336
    %v463 = vpack.c.b16 %v340, %v337
    %v464 = vpack.c.b16 %v344, %v341
    %v465 = vpack.c.b16 %v345, %v342
    %v466 = vpack.c.b16 %v346, %v343
    %v467 = vpack.c.b16 %v350, %v347
    %v468 = vpack.c.b16 %v351, %v348
    %v469 = vpack.c.b16 %v352, %v349
    %v470 = vpack.c.b16 %v356, %v353
    %v471 = vpack.c.b16 %v357, %v354
    %v472 = vpack.c.b16 %v358, %v355
    %v473 = vpack.c.b16 %v362, %v359
    %v474 = vpack.c.b16 %v363, %v360
    %v475 = vpack.c.b16 %v364, %v361
    %v476 = vpack.c.b16 %v368, %v365
    %v477 = vpack.c.b16 %v369, %v366
    %v478 = vpack.c.b16 %v370, %v367
    %v479 = vpack.c.b16 %v374, %v371
    %v480 = vpack.c.b16 %v375, %v372
    %v481 = vpack.c.b16 %v376, %v373
    %v482 = vpack.c.b16 %v380, %v377
    %v483 = vpack.c.b16 %v381, %v378
    %v484 = vpack.c.b16 %v382, %v379
    %v485 = vpack.c.b16 %v386, %v383
    %v486 = vpack.c.b16 %v387, %v384
    %v487 = vpack.c.b16 %v388, %v385
    %v488 = vpack.c.b16 %v392, %v389
    %v489 = vpack.c.b16 %v393, %v390
    %v490 = vpack.c.b16 %v394, %v391
    %v491 = vpack.c.b16 %v398, %v395
    %v492 = vpack.c.b16 %v399, %v396
    %v493 = vpack.c.b16 %v400, %v397
    %v494 = vpack.c.b16 %v404, %v401
    %v495 = vpack.c.b16 %v405, %v402
    %v496 = vpack.c.b16 %v406, %v403
    %v497 = vpack.c.b16 %v410, %v407
    %v498 = vpack.c.b16 %v411, %v408
    %v499 = vpack.c.b16 %v412, %v409
    %v500 = vpack.c.b16 %v416, %v413
    %v501 = vpack.c.b16 %v417, %v414
    %v502 = vpack.c.b16 %v418, %v415
    %v503 = vpack.c.b16 %v422, %v419
    %v504 = vpack.c.b16 %v423, %v420
    %v505 = vpack.c.b16 %v424, %v421
    %v506 = vpack.c.b16 %v428, %v425
    %v507 = vpack.c.b16 %v429, %v426
    %v508 = vpack.c.b16 %v430, %v427
    %v509 = vpack.c.b16 %v434, %v431
    %v510 = vpack.c.b16 %v435, %v432
    %v511 = vpack.c.b16 %v436, %v433
    %v512 = vpack.c.b16 %v440, %v437
    %v513 = vpack.c.b16 %v441, %v438
    %v514 = vpack.c.b16 %v442, %v439
    %587 = vmatprep.subr.bf16.mxu0 %v444
    %588 = vmatpush1.bf16.msra.mxu0 %v443
    %589 = vmatprep.subr.bf16.mxu0 %v447
    %590 = vmatpush1.bf16.msra.mxu0 %v446
    %591 = vmatprep.subr.bf16.mxu0 %v450
    %592 = vmatpush1.bf16.msra.mxu0 %v449
    %593 = vmatprep.subr.bf16.mxu0 %v453
    %594 = vmatpush1.bf16.msra.mxu0 %v452
    %595 = vmatprep.subr.bf16.mxu0 %v456
    %596 = vmatpush1.bf16.msra.mxu0 %v455
    %597 = vmatprep.subr.bf16.mxu0 %v459
    %598 = vmatpush1.bf16.msra.mxu0 %v458
    %599 = vmatprep.subr.bf16.mxu0 %v462
    %600 = vmatpush1.bf16.msra.mxu0 %v461
    %601 = vmatprep.subr.bf16.mxu0 %v465
    %602 = vmatpush1.bf16.msra.mxu0 %v464
    %603 = vmatprep.subr.bf16.mxu0 %v468
    %604 = vmatpush1.bf16.msra.mxu0 %v467
    %605 = vmatprep.subr.bf16.mxu0 %v471
    %606 = vmatpush1.bf16.msra.mxu0 %v470
    %607 = vmatprep.subr.bf16.mxu0 %v474
    %608 = vmatpush1.bf16.msra.mxu0 %v473
    %609 = vmatprep.subr.bf16.mxu0 %v477
    %610 = vmatpush1.bf16.msra.mxu0 %v476
    %611 = vmatprep.subr.bf16.mxu0 %v480
    %612 = vmatpush1.bf16.msra.mxu0 %v479
    %613 = vmatprep.subr.bf16.mxu0 %v483
    %614 = vmatpush1.bf16.msra.mxu0 %v482
    %615 = vmatprep.subr.bf16.mxu0 %v486
    %616 = vmatpush1.bf16.msra.mxu0 %v485
    %617 = vmatprep.subr.bf16.mxu0 %v489
    %618 = vmatpush1.bf16.msra.mxu0 %v488
    %619 = vmatprep.mubr.bf16.mxu0 %v198
    %620 = vmatmul.mubr.bf16.gmra.mrb[0].mxu0 %v197
    %v621 = vpop.f32.mrb[0].mxu0
    %v622 = vadd.f32 0.0, %v621
    %v623 = vpop.f32.mrb[0].mxu0
    %v624 = vadd.f32 0.0, %v623
    %v625 = vpop.f32.mrb[0].mxu0
    %v626 = vadd.f32 0.0, %v625
    %v627 = vpop.f32.mrb[0].mxu0
    %v628 = vadd.f32 0.0, %v627
    %629 = vdwg.mxu0
    %630 = vmatprep.subr.bf16.mxu0 %v492
    %631 = vmatpush1.bf16.msra.mxu0 %v491
    %632 = vmatprep.subr.bf16.mxu0 %v495
    %633 = vmatpush1.bf16.msra.mxu0 %v494
    %634 = vmatprep.subr.bf16.mxu0 %v498
    %635 = vmatpush1.bf16.msra.mxu0 %v497
    %636 = vmatprep.subr.bf16.mxu0 %v501
    %637 = vmatpush1.bf16.msra.mxu0 %v500
    %638 = vmatprep.subr.bf16.mxu0 %v504
    %639 = vmatpush1.bf16.msra.mxu0 %v503
    %640 = vmatprep.subr.bf16.mxu0 %v507
    %641 = vmatpush1.bf16.msra.mxu0 %v506
    %642 = vmatprep.subr.bf16.mxu0 %v510
    %643 = vmatpush1.bf16.msra.mxu0 %v509
    %644 = vmatprep.subr.bf16.mxu0 %v513
    %645 = vmatpush1.bf16.msra.mxu0 %v512
    %646 = vmatprep.subr.bf16.mxu0 0
    %647 = vmatpush1.bf16.msra.mxu0 0
    %648 = vmatprep.subr.bf16.mxu0 0
    %649 = vmatpush1.bf16.msra.mxu0 0
    %650 = vmatprep.subr.bf16.mxu0 0
    %651 = vmatpush1.bf16.msra.mxu0 0
    %652 = vmatprep.subr.bf16.mxu0 0
    %653 = vmatpush1.bf16.msra.mxu0 0
    %654 = vmatprep.subr.bf16.mxu0 0
    %655 = vmatpush1.bf16.msra.mxu0 0
    %656 = vmatprep.subr.bf16.mxu0 0
    %657 = vmatpush1.bf16.msra.mxu0 0
    %658 = vmatprep.subr.bf16.mxu0 0
    %659 = vmatpush1.bf16.msra.mxu0 0
    %660 = vmatprep.subr.bf16.mxu0 0
    %661 = vmatpush1.bf16.msra.mxu0 0
    %662 = vmatprep.mubr.bf16.mxu0 0
    %663 = vmatmul.mubr.bf16.gmra.mrb[0].mxu0 %v199
    %v664 = vpop.f32.mrb[0].mxu0
    %v665 = vadd.f32 %v622, %v664
    %v666 = vpop.f32.mrb[0].mxu0
    %v667 = vadd.f32 %v624, %v666
    %v668 = vpop.f32.mrb[0].mxu0
    %v669 = vadd.f32 %v626, %v668
    %v670 = vpop.f32.mrb[0].mxu0
    %v671 = vadd.f32 %v628, %v670
    %672 = vdwg.mxu0
    %673 = vmatprep.subr.bf16.mxu0 0
    %674 = vmatpush1.bf16.msra.mxu0 %v445
    %675 = vmatprep.subr.bf16.mxu0 0
    %676 = vmatpush1.bf16.msra.mxu0 %v448
    %677 = vmatprep.subr.bf16.mxu0 0
    %678 = vmatpush1.bf16.msra.mxu0 %v451
    %679 = vmatprep.subr.bf16.mxu0 0
    %680 = vmatpush1.bf16.msra.mxu0 %v454
    %681 = vmatprep.subr.bf16.mxu0 0
    %682 = vmatpush1.bf16.msra.mxu0 %v457
    %683 = vmatprep.subr.bf16.mxu0 0
    %684 = vmatpush1.bf16.msra.mxu0 %v460
    %685 = vmatprep.subr.bf16.mxu0 0
    %686 = vmatpush1.bf16.msra.mxu0 %v463
    %687 = vmatprep.subr.bf16.mxu0 0
    %688 = vmatpush1.bf16.msra.mxu0 %v466
    %689 = vmatprep.subr.bf16.mxu0 0
    %690 = vmatpush1.bf16.msra.mxu0 %v469
    %691 = vmatprep.subr.bf16.mxu0 0
    %692 = vmatpush1.bf16.msra.mxu0 %v472
    %693 = vmatprep.subr.bf16.mxu0 0
    %694 = vmatpush1.bf16.msra.mxu0 %v475
    %695 = vmatprep.subr.bf16.mxu0 0
    %696 = vmatpush1.bf16.msra.mxu0 %v478
    %697 = vmatprep.subr.bf16.mxu0 0
    %698 = vmatpush1.bf16.msra.mxu0 %v481
    %699 = vmatprep.subr.bf16.mxu0 0
    %700 = vmatpush1.bf16.msra.mxu0 %v484
    %701 = vmatprep.subr.bf16.mxu0 0
    %702 = vmatpush1.bf16.msra.mxu0 %v487
    %703 = vmatprep.subr.bf16.mxu0 0
    %704 = vmatpush1.bf16.msra.mxu0 %v490
    %705 = vmatprep.mubr.bf16.mxu0 %v198
    %706 = vmatmul.mubr.bf16.gmra.mrb[0].mxu0 %v197
    %v707 = vpop.f32.mrb[0].mxu0
    %v708 = vadd.f32 0.0, %v707
    %v709 = vpop.f32.mrb[0].mxu0
    %v710 = vpop.f32.mrb[0].mxu0
    %v711 = vadd.f32 0.0, %v710
    %v712 = vpop.f32.mrb[0].mxu0
    %713 = vdwg.mxu0
    %714 = vmatprep.subr.bf16.mxu0 0
    %715 = vmatpush1.bf16.msra.mxu0 %v493
    %716 = vmatprep.subr.bf16.mxu0 0
    %717 = vmatpush1.bf16.msra.mxu0 %v496
    %718 = vmatprep.subr.bf16.mxu0 0
    %719 = vmatpush1.bf16.msra.mxu0 %v499
    %720 = vmatprep.subr.bf16.mxu0 0
    %721 = vmatpush1.bf16.msra.mxu0 %v502
    %722 = vmatprep.subr.bf16.mxu0 0
    %723 = vmatpush1.bf16.msra.mxu0 %v505
    %724 = vmatprep.subr.bf16.mxu0 0
    %725 = vmatpush1.bf16.msra.mxu0 %v508
    %726 = vmatprep.subr.bf16.mxu0 0
    %727 = vmatpush1.bf16.msra.mxu0 %v511
    %728 = vmatprep.subr.bf16.mxu0 0
    %729 = vmatpush1.bf16.msra.mxu0 %v514
    %730 = vmatprep.subr.bf16.mxu0 0
    %731 = vmatpush1.bf16.msra.mxu0 0
    %732 = vmatprep.subr.bf16.mxu0 0
    %733 = vmatpush1.bf16.msra.mxu0 0
    %734 = vmatprep.subr.bf16.mxu0 0
    %735 = vmatpush1.bf16.msra.mxu0 0
    %736 = vmatprep.subr.bf16.mxu0 0
    %737 = vmatpush1.bf16.msra.mxu0 0
    %738 = vmatprep.subr.bf16.mxu0 0
    %739 = vmatpush1.bf16.msra.mxu0 0
    %740 = vmatprep.subr.bf16.mxu0 0
    %741 = vmatpush1.bf16.msra.mxu0 0
    %742 = vmatprep.subr.bf16.mxu0 0
    %743 = vmatpush1.bf16.msra.mxu0 0
    %744 = vmatprep.subr.bf16.mxu0 0
    %745 = vmatpush1.bf16.msra.mxu0 0
    %746 = vmatprep.mubr.bf16.mxu0 0
    %747 = vmatmul.mubr.bf16.gmra.mrb[0].mxu0 %v199
    %v748 = vpop.f32.mrb[0].mxu0
    %v749 = vadd.f32 %v708, %v748
    %v750 = vpop.f32.mrb[0].mxu0
    %v751 = vpop.f32.mrb[0].mxu0
    %v752 = vadd.f32 %v711, %v751
    %v753 = vpop.f32.mrb[0].mxu0
    %754 = vdwg.mxu0
    %s755 = smul.u32 4, 48
    %s756 = smul.u32 %s755, 3
    %s757 = sshll.u32 %s756, 4
    %758 = dma.done [#allocation3], %s757
    %v759 = vld [vmem:[#allocation2] sm:$0xff]
    %v760 = vld [vmem:[#allocation2 + $0x8] sm:$0xff]
    %v761 = vld [vmem:[#allocation2 + $0x10] sm:$0xff]
    %v762 = vld [vmem:[#allocation2 + $0x18] sm:$0xff]
    %v763 = vld [vmem:[#allocation2 + $0x20] sm:$0xff]
    %v764 = vld [vmem:[#allocation2 + $0x28] sm:$0xff]
    %v765 = vld [vmem:[#allocation2 + $0x30] sm:$0xff]
    %v766 = vld [vmem:[#allocation2 + $0x38] sm:$0xff]
    %v767 = vld [vmem:[#allocation2 + $0x40] sm:$0xff]
    %v768 = vld [vmem:[#allocation2 + $0x48] sm:$0xff]
    %v769 = vld [vmem:[#allocation2 + $0x50] sm:$0xff]
    %v770 = vld [vmem:[#allocation2 + $0x58] sm:$0xff]
    %v771 = vld [vmem:[#allocation2 + $0x60] sm:$0xff]
    %v772 = vld [vmem:[#allocation2 + $0x68] sm:$0xff]
    %v773 = vld [vmem:[#allocation2 + $0x70] sm:$0xff]
    %v774 = vld [vmem:[#allocation2 + $0x78] sm:$0xff]
    %v775 = vld [vmem:[#allocation2 + $0x80] sm:$0xff]
    %v776 = vld [vmem:[#allocation2 + $0x88] sm:$0xff]
    %v777 = vld [vmem:[#allocation2 + $0x90] sm:$0xff]
    %v778 = vld [vmem:[#allocation2 + $0x98] sm:$0xff]
    %v779 = vld [vmem:[#allocation2 + $0xa0] sm:$0xff]
    %v780 = vld [vmem:[#allocation2 + $0xa8] sm:$0xff]
    %v781 = vld [vmem:[#allocation2 + $0xb0] sm:$0xff]
    %v782 = vld [vmem:[#allocation2 + $0xb8] sm:$0xff]
    %v783 = vld [vmem:[#allocation2 + $0xc0] sm:$0xff]
    %v784 = vld [vmem:[#allocation2 + $0xc8] sm:$0xff]
    %v785 = vld [vmem:[#allocation2 + $0xd0] sm:$0xff]
    %v786 = vld [vmem:[#allocation2 + $0xd8] sm:$0xff]
    %v787 = vld [vmem:[#allocation2 + $0xe0] sm:$0xff]
    %v788 = vld [vmem:[#allocation2 + $0xe8] sm:$0xff]
    %v789 = vld [vmem:[#allocation2 + $0xf0] sm:$0xff]
    %v790 = vld [vmem:[#allocation2 + $0xf8] sm:$0xff]
    %v791 = vld [vmem:[#allocation2 + $0x100] sm:$0xff]
    %v792 = vld [vmem:[#allocation2 + $0x108] sm:$0xff]
    %v793 = vld [vmem:[#allocation2 + $0x110] sm:$0xff]
    %v794 = vld [vmem:[#allocation2 + $0x118] sm:$0xff]
    %v795 = vld [vmem:[#allocation2 + $0x120] sm:$0xff]
    %v796 = vld [vmem:[#allocation2 + $0x128] sm:$0xff]
    %v797 = vld [vmem:[#allocation2 + $0x130] sm:$0xff]
    %v798 = vld [vmem:[#allocation2 + $0x138] sm:$0xff]
    %v799 = vld [vmem:[#allocation2 + $0x140] sm:$0xff]
    %v800 = vld [vmem:[#allocation2 + $0x148] sm:$0xff]
    %v801 = vld [vmem:[#allocation2 + $0x150] sm:$0xff]
    %v802 = vld [vmem:[#allocation2 + $0x158] sm:$0xff]
    %v803 = vld [vmem:[#allocation2 + $0x160] sm:$0xff]
    %v804 = vld [vmem:[#allocation2 + $0x168] sm:$0xff]
    %v805 = vld [vmem:[#allocation2 + $0x170] sm:$0xff]
    %v806 = vld [vmem:[#allocation2 + $0x178] sm:$0xff]
    %v807 = vld [vmem:[#allocation2 + $0x180] sm:$0xff]
    %v808 = vld [vmem:[#allocation2 + $0x188] sm:$0xff]
    %v809 = vld [vmem:[#allocation2 + $0x190] sm:$0xff]
    %v810 = vld [vmem:[#allocation2 + $0x198] sm:$0xff]
    %v811 = vld [vmem:[#allocation2 + $0x1a0] sm:$0xff]
    %v812 = vld [vmem:[#allocation2 + $0x1a8] sm:$0xff]
    %v813 = vld [vmem:[#allocation2 + $0x1b0] sm:$0xff]
    %v814 = vld [vmem:[#allocation2 + $0x1b8] sm:$0xff]
    %v815 = vld [vmem:[#allocation2 + $0x1c0] sm:$0xff]
    %v816 = vld [vmem:[#allocation2 + $0x1c8] sm:$0xff]
    %v817 = vld [vmem:[#allocation2 + $0x1d0] sm:$0xff]
    %v818 = vld [vmem:[#allocation2 + $0x1d8] sm:$0xff]
    %v819 = vld [vmem:[#allocation2 + $0x1e0] sm:$0xff]
    %v820 = vld [vmem:[#allocation2 + $0x1e8] sm:$0xff]
    %v821 = vld [vmem:[#allocation2 + $0x1f0] sm:$0xff]
    %v822 = vld [vmem:[#allocation2 + $0x1f8] sm:$0xff]
    %v823 = vld [vmem:[#allocation2 + $0x200] sm:$0xff]
    %v824 = vld [vmem:[#allocation2 + $0x208] sm:$0xff]
    %v825 = vld [vmem:[#allocation2 + $0x210] sm:$0xff]
    %v826 = vld [vmem:[#allocation2 + $0x218] sm:$0xff]
    %v827 = vld [vmem:[#allocation2 + $0x220] sm:$0xff]
    %v828 = vld [vmem:[#allocation2 + $0x228] sm:$0xff]
    %v829 = vld [vmem:[#allocation2 + $0x230] sm:$0xff]
    %v830 = vld [vmem:[#allocation2 + $0x238] sm:$0xff]
    %v835 = vunpack.c.l.b16 %v87
    %v836 = vunpack.c.h.b16 %v87
    %v837 = vunpack.c.l.b16 %v88
    %v838 = vunpack.c.l.b16 %v89
    %v839 = vunpack.c.h.b16 %v89
    %v840 = vunpack.c.l.b16 %v90
    %v841 = vpack.c.b16 %v838, %v835
    %v842 = vpack.c.b16 %v839, %v836
    %v843 = vpack.c.b16 %v840, %v837
    %847 = vmatprep.subr.bf16.mxu0 %v760
    %848 = vmatpush1.bf16.msra.mxu0 %v759
    %849 = vmatprep.subr.bf16.mxu0 %v763
    %850 = vmatpush1.bf16.msra.mxu0 %v762
    %851 = vmatprep.subr.bf16.mxu0 %v766
    %852 = vmatpush1.bf16.msra.mxu0 %v765
    %853 = vmatprep.subr.bf16.mxu0 %v769
    %854 = vmatpush1.bf16.msra.mxu0 %v768
    %855 = vmatprep.subr.bf16.mxu0 %v772
    %856 = vmatpush1.bf16.msra.mxu0 %v771
    %857 = vmatprep.subr.bf16.mxu0 %v775
    %858 = vmatpush1.bf16.msra.mxu0 %v774
    %859 = vmatprep.subr.bf16.mxu0 %v778
    %860 = vmatpush1.bf16.msra.mxu0 %v777
    %861 = vmatprep.subr.bf16.mxu0 %v781
    %862 = vmatpush1.bf16.msra.mxu0 %v780
    %863 = vmatprep.subr.bf16.mxu0 %v784
    %864 = vmatpush1.bf16.msra.mxu0 %v783
    %865 = vmatprep.subr.bf16.mxu0 %v787
    %866 = vmatpush1.bf16.msra.mxu0 %v786
    %867 = vmatprep.subr.bf16.mxu0 %v790
    %868 = vmatpush1.bf16.msra.mxu0 %v789
    %869 = vmatprep.subr.bf16.mxu0 %v793
    %870 = vmatpush1.bf16.msra.mxu0 %v792
    %871 = vmatprep.subr.bf16.mxu0 %v796
    %872 = vmatpush1.bf16.msra.mxu0 %v795
    %873 = vmatprep.subr.bf16.mxu0 %v799
    %874 = vmatpush1.bf16.msra.mxu0 %v798
    %875 = vmatprep.subr.bf16.mxu0 %v802
    %876 = vmatpush1.bf16.msra.mxu0 %v801
    %877 = vmatprep.subr.bf16.mxu0 %v805
    %878 = vmatpush1.bf16.msra.mxu0 %v804
    %879 = vmatprep.mubr.bf16.mxu0 %v842
    %880 = vmatmul.mubr.bf16.gmra.mrb[0].mxu0 %v841
    %v881 = vpop.f32.mrb[0].mxu0
    %v882 = vadd.f32 0.0, %v881
    %v883 = vpop.f32.mrb[0].mxu0
    %v884 = vadd.f32 0.0, %v883
    %v885 = vpop.f32.mrb[0].mxu0
    %v886 = vadd.f32 0.0, %v885
    %v887 = vpop.f32.mrb[0].mxu0
    %v888 = vadd.f32 0.0, %v887
    %889 = vdwg.mxu0
    %890 = vmatprep.subr.bf16.mxu0 %v808
    %891 = vmatpush1.bf16.msra.mxu0 %v807
    %892 = vmatprep.subr.bf16.mxu0 %v811
    %893 = vmatpush1.bf16.msra.mxu0 %v810
    %894 = vmatprep.subr.bf16.mxu0 %v814
    %895 = vmatpush1.bf16.msra.mxu0 %v813
    %896 = vmatprep.subr.bf16.mxu0 %v817
    %897 = vmatpush1.bf16.msra.mxu0 %v816
    %898 = vmatprep.subr.bf16.mxu0 %v820
    %899 = vmatpush1.bf16.msra.mxu0 %v819
    %900 = vmatprep.subr.bf16.mxu0 %v823
    %901 = vmatpush1.bf16.msra.mxu0 %v822
    %902 = vmatprep.subr.bf16.mxu0 %v826
    %903 = vmatpush1.bf16.msra.mxu0 %v825
    %904 = vmatprep.subr.bf16.mxu0 %v829
    %905 = vmatpush1.bf16.msra.mxu0 %v828
    %906 = vmatprep.subr.bf16.mxu0 0
    %907 = vmatpush1.bf16.msra.mxu0 0
    %908 = vmatprep.subr.bf16.mxu0 0
    %909 = vmatpush1.bf16.msra.mxu0 0
    %910 = vmatprep.subr.bf16.mxu0 0
    %911 = vmatpush1.bf16.msra.mxu0 0
    %912 = vmatprep.subr.bf16.mxu0 0
    %913 = vmatpush1.bf16.msra.mxu0 0
    %914 = vmatprep.subr.bf16.mxu0 0
    %915 = vmatpush1.bf16.msra.mxu0 0
    %916 = vmatprep.subr.bf16.mxu0 0
    %917 = vmatpush1.bf16.msra.mxu0 0
    %918 = vmatprep.subr.bf16.mxu0 0
    %919 = vmatpush1.bf16.msra.mxu0 0
    %920 = vmatprep.subr.bf16.mxu0 0
    %921 = vmatpush1.bf16.msra.mxu0 0
    %922 = vmatprep.mubr.bf16.mxu0 0
    %923 = vmatmul.mubr.bf16.gmra.mrb[0].mxu0 %v843
    %v924 = vpop.f32.mrb[0].mxu0
    %v925 = vadd.f32 %v882, %v924
    %v926 = vpop.f32.mrb[0].mxu0
    %v927 = vadd.f32 %v884, %v926
    %v928 = vpop.f32.mrb[0].mxu0
    %v929 = vadd.f32 %v886, %v928
    %v930 = vpop.f32.mrb[0].mxu0
    %v931 = vadd.f32 %v888, %v930
    %932 = vdwg.mxu0
    %933 = vmatprep.subr.bf16.mxu0 0
    %934 = vmatpush1.bf16.msra.mxu0 %v761
    %935 = vmatprep.subr.bf16.mxu0 0
    %936 = vmatpush1.bf16.msra.mxu0 %v764
    %937 = vmatprep.subr.bf16.mxu0 0
    %938 = vmatpush1.bf16.msra.mxu0 %v767
    %939 = vmatprep.subr.bf16.mxu0 0
    %940 = vmatpush1.bf16.msra.mxu0 %v770
    %941 = vmatprep.subr.bf16.mxu0 0
    %942 = vmatpush1.bf16.msra.mxu0 %v773
    %943 = vmatprep.subr.bf16.mxu0 0
    %944 = vmatpush1.bf16.msra.mxu0 %v776
    %945 = vmatprep.subr.bf16.mxu0 0
    %946 = vmatpush1.bf16.msra.mxu0 %v779
    %947 = vmatprep.subr.bf16.mxu0 0
    %948 = vmatpush1.bf16.msra.mxu0 %v782
    %949 = vmatprep.subr.bf16.mxu0 0
    %950 = vmatpush1.bf16.msra.mxu0 %v785
    %951 = vmatprep.subr.bf16.mxu0 0
    %952 = vmatpush1.bf16.msra.mxu0 %v788
    %953 = vmatprep.subr.bf16.mxu0 0
    %954 = vmatpush1.bf16.msra.mxu0 %v791
    %955 = vmatprep.subr.bf16.mxu0 0
    %956 = vmatpush1.bf16.msra.mxu0 %v794
    %957 = vmatprep.subr.bf16.mxu0 0
    %958 = vmatpush1.bf16.msra.mxu0 %v797
    %959 = vmatprep.subr.bf16.mxu0 0
    %960 = vmatpush1.bf16.msra.mxu0 %v800
    %961 = vmatprep.subr.bf16.mxu0 0
    %962 = vmatpush1.bf16.msra.mxu0 %v803
    %963 = vmatprep.subr.bf16.mxu0 0
    %964 = vmatpush1.bf16.msra.mxu0 %v806
    %965 = vmatprep.mubr.bf16.mxu0 %v842
    %966 = vmatmul.mubr.bf16.gmra.mrb[0].mxu0 %v841
    %v967 = vpop.f32.mrb[0].mxu0
    %v968 = vadd.f32 0.0, %v967
    %v969 = vpop.f32.mrb[0].mxu0
    %v970 = vpop.f32.mrb[0].mxu0
    %v971 = vadd.f32 0.0, %v970
    %v972 = vpop.f32.mrb[0].mxu0
    %973 = vdwg.mxu0
    %974 = vmatprep.subr.bf16.mxu0 0
    %975 = vmatpush1.bf16.msra.mxu0 %v809
    %976 = vmatprep.subr.bf16.mxu0 0
    %977 = vmatpush1.bf16.msra.mxu0 %v812
    %978 = vmatprep.subr.bf16.mxu0 0
    %979 = vmatpush1.bf16.msra.mxu0 %v815
    %980 = vmatprep.subr.bf16.mxu0 0
    %981 = vmatpush1.bf16.msra.mxu0 %v818
    %982 = vmatprep.subr.bf16.mxu0 0
    %983 = vmatpush1.bf16.msra.mxu0 %v821
    %984 = vmatprep.subr.bf16.mxu0 0
    %985 = vmatpush1.bf16.msra.mxu0 %v824
    %986 = vmatprep.subr.bf16.mxu0 0
    %987 = vmatpush1.bf16.msra.mxu0 %v827
    %988 = vmatprep.subr.bf16.mxu0 0
    %989 = vmatpush1.bf16.msra.mxu0 %v830
    %990 = vmatprep.subr.bf16.mxu0 0
    %991 = vmatpush1.bf16.msra.mxu0 0
    %992 = vmatprep.subr.bf16.mxu0 0
    %993 = vmatpush1.bf16.msra.mxu0 0
    %994 = vmatprep.subr.bf16.mxu0 0
    %995 = vmatpush1.bf16.msra.mxu0 0
    %996 = vmatprep.subr.bf16.mxu0 0
    %997 = vmatpush1.bf16.msra.mxu0 0
    %998 = vmatprep.subr.bf16.mxu0 0
    %999 = vmatpush1.bf16.msra.mxu0 0
    %1000 = vmatprep.subr.bf16.mxu0 0
    %1001 = vmatpush1.bf16.msra.mxu0 0
    %1002 = vmatprep.subr.bf16.mxu0 0
    %1003 = vmatpush1.bf16.msra.mxu0 0
    %1004 = vmatprep.subr.bf16.mxu0 0
    %1005 = vmatpush1.bf16.msra.mxu0 0
    %1006 = vmatprep.mubr.bf16.mxu0 0
    %1007 = vmatmul.mubr.bf16.gmra.mrb[0].mxu0 %v843
    %v1008 = vpop.f32.mrb[0].mxu0
    %v1009 = vadd.f32 %v968, %v1008
    %v1010 = vpop.f32.mrb[0].mxu0
    %v1011 = vpop.f32.mrb[0].mxu0
    %v1012 = vadd.f32 %v971, %v1011
    %v1013 = vpop.f32.mrb[0].mxu0
    %1014 = vdwg.mxu0
    %v1015 = vpack.c.bf16 %v665, %v665
    %v1016 = vpack.c.bf16 %v667, %v667
    %v1017 = vpack.c.bf16 %v749, %v749
    %v1018 = vpack.c.bf16 %v669, %v669
    %v1019 = vpack.c.bf16 %v671, %v671
    %v1020 = vpack.c.bf16 %v752, %v752
    %v1021 = vpack.c.bf16 %v925, %v925
    %v1022 = vpack.c.bf16 %v927, %v927
    %v1023 = vpack.c.bf16 %v1009, %v1009
    %v1024 = vpack.c.bf16 %v929, %v929
    %v1025 = vpack.c.bf16 %v931, %v931
    %v1026 = vpack.c.bf16 %v1012, %v1012
    %1027 = vmatprep.subr.bf16.mxu0 %v1022
    %1028 = vmatpush1.bf16.xpose.msra.mxu0 %v1021
    %1029 = vmatprep.subr.bf16.mxu0 0
    %1030 = vmatpush1.bf16.xpose.msra.mxu0 0
    %1031 = vmatprep.subr.bf16.mxu0 0
    %1032 = vmatpush1.bf16.xpose.msra.mxu0 0
    %1033 = vmatprep.subr.bf16.mxu0 0
    %1034 = vmatpush1.bf16.xpose.msra.mxu0 0
    %1035 = vmatprep.subr.bf16.mxu0 0
    %1036 = vmatpush1.bf16.xpose.msra.mxu0 0
    %1037 = vmatprep.subr.bf16.mxu0 0
    %1038 = vmatpush1.bf16.xpose.msra.mxu0 0
    %1039 = vmatprep.subr.bf16.mxu0 0
    %1040 = vmatpush1.bf16.xpose.msra.mxu0 0
    %1041 = vmatprep.subr.bf16.mxu0 0
    %1042 = vmatpush1.bf16.xpose.msra.mxu0 0
    %1043 = vmatprep.subr.bf16.mxu0 0
    %1044 = vmatpush1.bf16.xpose.msra.mxu0 0
    %1045 = vmatprep.subr.bf16.mxu0 0
    %1046 = vmatpush1.bf16.xpose.msra.mxu0 0
    %1047 = vmatprep.subr.bf16.mxu0 0
    %1048 = vmatpush1.bf16.xpose.msra.mxu0 0
    %1049 = vmatprep.subr.bf16.mxu0 0
    %1050 = vmatpush1.bf16.xpose.msra.mxu0 0
    %1051 = vmatprep.subr.bf16.mxu0 0
    %1052 = vmatpush1.bf16.xpose.msra.mxu0 0
    %1053 = vmatprep.subr.bf16.mxu0 0
    %1054 = vmatpush1.bf16.xpose.msra.mxu0 0
    %1055 = vmatprep.subr.bf16.mxu0 0
    %1056 = vmatpush1.bf16.xpose.msra.mxu0 0
    %1057 = vmatprep.subr.bf16.mxu0 0
    %1058 = vmatpush1.bf16.xpose.msra.mxu0 0
    %1059 = vmatprep.mubr.bf16.mxu0 %v1016
    %1060 = vmatmul.mubr.bf16.gmra.mrb[0].mxu0 %v1015
    %v1061 = vpop.f32.mrb[0].mxu0
    %v1062 = vadd.f32 0.0, %v1061
    %v1063 = vpop.f32.mrb[0].mxu0
    %v1064 = vpop.f32.mrb[0].mxu0
    %v1065 = vpop.f32.mrb[0].mxu0
    %1066 = vdwg.mxu0
    %1067 = vmatprep.subr.bf16.mxu0 0
    %1068 = vmatpush1.bf16.xpose.msra.mxu0 %v1023
    %1069 = vmatprep.subr.bf16.mxu0 0
    %1070 = vmatpush1.bf16.xpose.msra.mxu0 0
    %1071 = vmatprep.subr.bf16.mxu0 0
    %1072 = vmatpush1.bf16.xpose.msra.mxu0 0
    %1073 = vmatprep.subr.bf16.mxu0 0
    %1074 = vmatpush1.bf16.xpose.msra.mxu0 0
    %1075 = vmatprep.subr.bf16.mxu0 0
    %1076 = vmatpush1.bf16.xpose.msra.mxu0 0
    %1077 = vmatprep.subr.bf16.mxu0 0
    %1078 = vmatpush1.bf16.xpose.msra.mxu0 0
    %1079 = vmatprep.subr.bf16.mxu0 0
    %1080 = vmatpush1.bf16.xpose.msra.mxu0 0
    %1081 = vmatprep.subr.bf16.mxu0 0
    %1082 = vmatpush1.bf16.xpose.msra.mxu0 0
    %1083 = vmatprep.subr.bf16.mxu0 0
    %1084 = vmatpush1.bf16.xpose.msra.mxu0 0
    %1085 = vmatprep.subr.bf16.mxu0 0
    %1086 = vmatpush1.bf16.xpose.msra.mxu0 0
    %1087 = vmatprep.subr.bf16.mxu0 0
    %1088 = vmatpush1.bf16.xpose.msra.mxu0 0
    %1089 = vmatprep.subr.bf16.mxu0 0
    %1090 = vmatpush1.bf16.xpose.msra.mxu0 0
    %1091 = vmatprep.subr.bf16.mxu0 0
    %1092 = vmatpush1.bf16.xpose.msra.mxu0 0
    %1093 = vmatprep.subr.bf16.mxu0 0
    %1094 = vmatpush1.bf16.xpose.msra.mxu0 0
    %1095 = vmatprep.subr.bf16.mxu0 0
    %1096 = vmatpush1.bf16.xpose.msra.mxu0 0
    %1097 = vmatprep.subr.bf16.mxu0 0
    %1098 = vmatpush1.bf16.xpose.msra.mxu0 0
    %1099 = vmatprep.mubr.bf16.mxu0 0
    %1100 = vmatmul.mubr.bf16.gmra.mrb[0].mxu0 %v1017
    %v1101 = vpop.f32.mrb[0].mxu0
    %v1102 = vadd.f32 %v1062, %v1101
    %v1103 = vpop.f32.mrb[0].mxu0
    %v1104 = vpop.f32.mrb[0].mxu0
    %v1105 = vpop.f32.mrb[0].mxu0
    %1106 = vdwg.mxu0
    %1107 = vmatprep.subr.bf16.mxu0 %v1025
    %1108 = vmatpush1.bf16.xpose.msra.mxu0 %v1024
    %1109 = vmatprep.subr.bf16.mxu0 0
    %1110 = vmatpush1.bf16.xpose.msra.mxu0 0
    %1111 = vmatprep.subr.bf16.mxu0 0
    %1112 = vmatpush1.bf16.xpose.msra.mxu0 0
    %1113 = vmatprep.subr.bf16.mxu0 0
    %1114 = vmatpush1.bf16.xpose.msra.mxu0 0
    %1115 = vmatprep.subr.bf16.mxu0 0
    %1116 = vmatpush1.bf16.xpose.msra.mxu0 0
    %1117 = vmatprep.subr.bf16.mxu0 0
    %1118 = vmatpush1.bf16.xpose.msra.mxu0 0
    %1119 = vmatprep.subr.bf16.mxu0 0
    %1120 = vmatpush1.bf16.xpose.msra.mxu0 0
    %1121 = vmatprep.subr.bf16.mxu0 0
    %1122 = vmatpush1.bf16.xpose.msra.mxu0 0
    %1123 = vmatprep.subr.bf16.mxu0 0
    %1124 = vmatpush1.bf16.xpose.msra.mxu0 0
    %1125 = vmatprep.subr.bf16.mxu0 0
    %1126 = vmatpush1.bf16.xpose.msra.mxu0 0
    %1127 = vmatprep.subr.bf16.mxu0 0
    %1128 = vmatpush1.bf16.xpose.msra.mxu0 0
    %1129 = vmatprep.subr.bf16.mxu0 0
    %1130 = vmatpush1.bf16.xpose.msra.mxu0 0
    %1131 = vmatprep.subr.bf16.mxu0 0
    %1132 = vmatpush1.bf16.xpose.msra.mxu0 0
    %1133 = vmatprep.subr.bf16.mxu0 0
    %1134 = vmatpush1.bf16.xpose.msra.mxu0 0
    %1135 = vmatprep.subr.bf16.mxu0 0
    %1136 = vmatpush1.bf16.xpose.msra.mxu0 0
    %1137 = vmatprep.subr.bf16.mxu0 0
    %1138 = vmatpush1.bf16.xpose.msra.mxu0 0
    %1139 = vmatprep.mubr.bf16.mxu0 %v1019
    %1140 = vmatmul.mubr.bf16.gmra.mrb[0].mxu0 %v1018
    %v1141 = vpop.f32.mrb[0].mxu0
    %v1142 = vadd.f32 0.0, %v1141
    %v1143 = vpop.f32.mrb[0].mxu0
    %v1144 = vpop.f32.mrb[0].mxu0
    %v1145 = vpop.f32.mrb[0].mxu0
    %1146 = vdwg.mxu0
    %1147 = vmatprep.subr.bf16.mxu0 0
    %1148 = vmatpush1.bf16.xpose.msra.mxu0 %v1026
    %1149 = vmatprep.subr.bf16.mxu0 0
    %1150 = vmatpush1.bf16.xpose.msra.mxu0 0
    %1151 = vmatprep.subr.bf16.mxu0 0
    %1152 = vmatpush1.bf16.xpose.msra.mxu0 0
    %1153 = vmatprep.subr.bf16.mxu0 0
    %1154 = vmatpush1.bf16.xpose.msra.mxu0 0
    %1155 = vmatprep.subr.bf16.mxu0 0
    %1156 = vmatpush1.bf16.xpose.msra.mxu0 0
    %1157 = vmatprep.subr.bf16.mxu0 0
    %1158 = vmatpush1.bf16.xpose.msra.mxu0 0
    %1159 = vmatprep.subr.bf16.mxu0 0
    %1160 = vmatpush1.bf16.xpose.msra.mxu0 0
    %1161 = vmatprep.subr.bf16.mxu0 0
    %1162 = vmatpush1.bf16.xpose.msra.mxu0 0
    %1163 = vmatprep.subr.bf16.mxu0 0
    %1164 = vmatpush1.bf16.xpose.msra.mxu0 0
    %1165 = vmatprep.subr.bf16.mxu0 0
    %1166 = vmatpush1.bf16.xpose.msra.mxu0 0
    %1167 = vmatprep.subr.bf16.mxu0 0
    %1168 = vmatpush1.bf16.xpose.msra.mxu0 0
    %1169 = vmatprep.subr.bf16.mxu0 0
    %1170 = vmatpush1.bf16.xpose.msra.mxu0 0
    %1171 = vmatprep.subr.bf16.mxu0 0
    %1172 = vmatpush1.bf16.xpose.msra.mxu0 0
    %1173 = vmatprep.subr.bf16.mxu0 0
    %1174 = vmatpush1.bf16.xpose.msra.mxu0 0
    %1175 = vmatprep.subr.bf16.mxu0 0
    %1176 = vmatpush1.bf16.xpose.msra.mxu0 0
    %1177 = vmatprep.subr.bf16.mxu0 0
    %1178 = vmatpush1.bf16.xpose.msra.mxu0 0
    %1179 = vmatprep.mubr.bf16.mxu0 0
    %1180 = vmatmul.mubr.bf16.gmra.mrb[0].mxu0 %v1020
    %v1181 = vpop.f32.mrb[0].mxu0
    %v1182 = vadd.f32 %v1142, %v1181
    %v1183 = vpop.f32.mrb[0].mxu0
    %v1184 = vpop.f32.mrb[0].mxu0
    %v1185 = vpop.f32.mrb[0].mxu0
    %1186 = vdwg.mxu0
    %v1187 = vmul.f32 %v1102, 0.05103104
    %v1188 = vmul.f32 %v1182, 0.05103104
    %vm1189 = vcmask 64512
    %v1190 = vsel %vm1189, %v1187, -inf
    %v1191 = vrot.slane %v1190, 4
    %v1192 = vmax.f32 %v1190, %v1191
    %v1193 = vrot.slane %v1192, 2
    %v1194 = vmax.f32 %v1192, %v1193
    %v1195 = vrot.slane %v1194, 1
    %v1196 = vmax.f32 %v1194, %v1195
    %v1197 = vsel %vm1189, %v1188, -inf
    %v1198 = vrot.slane %v1197, 4
    %v1199 = vmax.f32 %v1197, %v1198
    %v1200 = vrot.slane %v1199, 2
    %v1201 = vmax.f32 %v1199, %v1200
    %v1202 = vrot.slane %v1201, 1
    %v1203 = vmax.f32 %v1201, %v1202
    %v1204 = vsub.f32 %v1187, %v1196
    %v1205 = vsub.f32 %v1188, %v1203
    %v1206 = vmul.f32 %v1204, 1.442695
    %v1207 = vpow.pop %v1206
    %v1208 = vmul.f32 %v1205, 1.442695
    %v1209 = vpow.pop %v1208
    %v1210 = vsel %vm1189, %v1207, 0.0
    %v1211 = vrot.slane %v1210, 4
    %v1212 = vadd.f32 %v1210, %v1211
    %v1213 = vrot.slane %v1212, 2
    %v1214 = vadd.f32 %v1212, %v1213
    %v1215 = vrot.slane %v1214, 1
    %v1216 = vadd.f32 %v1214, %v1215
    %v1217 = vsel %vm1189, %v1209, 0.0
    %v1218 = vrot.slane %v1217, 4
    %v1219 = vadd.f32 %v1217, %v1218
    %v1220 = vrot.slane %v1219, 2
    %v1221 = vadd.f32 %v1219, %v1220
    %v1222 = vrot.slane %v1221, 1
    %v1223 = vadd.f32 %v1221, %v1222
    %v1224 = vrcp.pop %v1216
    %v1225 = vmul.f32 %v1207, %v1224
    %v1226 = vrcp.pop %v1223
    %v1227 = vmul.f32 %v1209, %v1226
    %v1228 = vsel %vm1189, %v1225, -inf
    %1229 = vmax.xlane.f32.xlu0 %v1228
    %v1230 = vpop.xlane.xlu0 %1229
    %v1231 = vsel %vm1189, %v1227, -inf
    %1232 = vmax.xlane.f32.xlu0 %v1231
    %v1233 = vpop.xlane.xlu0 %1232
    %v1234 = vsub.f32 %v1230, %v1225
    %v1235 = vsub.f32 %v1233, %v1227
    %v1236 = vld [vmem:[%s4] sm:$0xff]
    %v1237 = vld [vmem:[%s4 + $0x8] sm:$0xff]
    %v1238 = vadd.f32 %v1234, %v1236
    %v1239 = vadd.f32 %v1235, %v1237
    %1242 = vrot.lane.b32.xlu0 %v1225, 8
    %v1243 = vpop.permute.xlu0 %1242
    %1244 = vrot.lane.b32.xlu0 %v1227, 8
    %v1245 = vpop.permute.xlu0 %1244
    %v1248 = vsel %vm1189, %v1238, %v1243
    %v1249 = vsel %vm1189, %v1239, %v1245
    %vm1250 = vcmask 130048
    %1251 = vst.msk [vmem:[#allocation9] sm:$0xff] %vm1250, %v1248
    %1252 = vst.msk [vmem:[#allocation9 + $0x8] sm:$0xff] %vm1250, %v1249
    // Predicated region
    $region26: #{tpu_custom_call.1} parent=1 // pred_check
      _
    $region27: #{tpu_custom_call.1} parent=1 // pred_check_branch
      %1254 = sbr.rel (0) target = $region29
    $region28: #{tpu_custom_call.1} parent=1 // pred_region
      %s1256 = ssub.s32 256, 256
      %1257 = vsyncadd [#allocation6], %s1256
      %s1258 = sshll.u32 [#allocation9], 4
      %s1259 = int_to_ptr.vmem [resolvable:$true] %s1258
      %1264 = dma.vmem_to_hbm [thread:$0]  %s1259, 256, %s5, [#allocation6], 128, 128, 8
    $region29: #{tpu_custom_call.1} parent=1 // pred_fallthru
      _
    // Predicated region
    $region30: #{tpu_custom_call.1} parent=1 // pred_check
      _
    $region31: #{tpu_custom_call.1} parent=1 // pred_check_branch
      %1266 = sbr.rel (0) target = $region33
    $region32: #{tpu_custom_call.1} parent=1 // pred_region
      %1267 = dma.done [#allocation6], 256
    $region33: #{tpu_custom_call.1} parent=1 // pred_fallthru
      _
    %1268 = vsyncpa [#allocation5], 1
    %1269 = vsyncpa [#allocation8], 1
    %1270 = vsyncpa [#allocation6], 1
  %1271 = vsyncmov [#allocation3]
  %s1272 = vpop.sfrf %1271
  %p1273 = scmp.eq.s32.totalorder %s1272, 0
  %p1274 = pneg %p1273
  %1276 = shalt.err (%p1274)

</llo_original>
